<compile_context>
chip_gen: v5e
topology: v5e:2x2
jax: 0.10.0
libtpu: 0.0.40
codegen_flags: <defaults>
</compile_context>

<pallas_src>
import functools

import numpy as np

import jax
import jax.numpy as jnp
from jax.experimental import pallas as pl
from jax.experimental.pallas import tpu as pltpu

BN_EPS = 1e-5


def _round_up(x, m):
    return -(-x // m) * m


def _padded_vmem_bytes(shape, dtype):
    """VMEM bytes of one buffer, (sublane, 128-lane) tile-padding aware."""
    itemsize = np.dtype(dtype).itemsize
    rows = shape[-2] if len(shape) >= 2 else 1
    cols = shape[-1]
    sublanes = max(8, 32 // itemsize)          # 8 for f32, 16 for bf16
    lead = 1
    for d in shape[:-2]:
        lead *= int(d)
    return lead * _round_up(int(rows), sublanes) * _round_up(int(cols), 128) * itemsize


# ---------------------------------------------------------------------------
# Kernel
# ---------------------------------------------------------------------------
def _ncf_kernel(num_layers, mlp_dim, num_factors, *refs):
    """refs layout:
        [0] packed activation tile (TB, 2*Dmlp + 2*F), bf16
            lanes: [user_mlp | item_mlp | user_gmf | item_gmf]
        [1] W0 (2*Dmlp, Dmlp) bf16   [2] b0 (1, Dmlp) f32
        then per layer i = 1 .. L-1: W_i (in_i, out_i) bf16, b_i (1, out_i) f32
             (eval-mode BN of layer i-1 already folded into W_i / b_i)
        then: wg (1, F) f32, wm (1, F) f32, bf (1, 1) f32
        last: output ref (TB, 1) f32
    """
    act = refs[0][...]                       # (TB, 2*Dmlp + 2*F) bf16
    d_mlp_in = 2 * mlp_dim

    w0 = refs[1][...]
    b0 = refs[2][...]
    # MLP layer 0: single K = 2*Dmlp matmul against the packed MLP halves.
    x = jnp.dot(act[:, :d_mlp_in], w0, preferred_element_type=jnp.float32)
    x = jnp.maximum(x + b0, 0.0)

    idx = 3
    for _ in range(num_layers - 1):
        w = refs[idx][...]
        b = refs[idx + 1][...]
        idx += 2
        # Previous layer's BatchNorm (eval) is folded into (w, b).
        x = jnp.dot(x.astype(w.dtype), w, preferred_element_type=jnp.float32)
        x = jnp.maximum(x + b, 0.0)

    wg = refs[idx][...]        # (1, F): 0.5 * predict weights (GMF half)
    wm = refs[idx + 1][...]    # (1, F): 0.5 * BN_{L-1} scale * predict (MLP half)
    bf = refs[idx + 2][...]    # (1, 1): folded predict bias
    out_ref = refs[idx + 3]

    # GMF path on the VPU in f32 (v5e has no bf16 VPU).
    ugmf = act[:, d_mlp_in:d_mlp_in + num_factors].astype(jnp.float32)
    igmf = act[:, d_mlp_in + num_factors:d_mlp_in + 2 * num_factors].astype(jnp.float32)

    # Fused final head: one cross-lane reduce instead of two, no N=1 matmul.
    combined = ugmf * igmf * wg + x * wm     # (TB, F) f32
    out_ref[...] = jnp.sum(combined, axis=-1, keepdims=True) + bf


# ---------------------------------------------------------------------------
# Parameter folding (wrapper-side, one-time layout/affine plumbing)
# ---------------------------------------------------------------------------
def fold_params(params, compute_dtype=jnp.bfloat16):
    """Pre-transpose weights to (in, out), fold eval-mode BatchNorm + the 0.5
    scales into downstream weights/biases, and cast storage to bf16."""
    layers = params["mlp_layers"]
    num_layers = len(layers)
    F = params["predict_W"].shape[1] // 2

    folded = []
    s_prev = t_prev = None
    for i, layer in enumerate(layers):
        Wt = layer["W"].astype(jnp.float32).T            # (in, out)
        b = layer["b"].astype(jnp.float32)               # (1, out)
        if i == 0:
            W_eff, b_eff = Wt, b
        else:
            W_eff = s_prev[0][:, None] * Wt              # fold BN_{i-1} scale
            b_eff = b + t_prev @ Wt                      # fold BN_{i-1} shift
        s = layer["gamma"] * jax.lax.rsqrt(layer["rvar"] + BN_EPS)   # (1, out)
        t = layer["beta"] - layer["rmean"] * s                       # (1, out)
        folded.append((W_eff.astype(compute_dtype), b_eff))
        s_prev, t_prev = s, t

    W0, b0 = folded[0]
    Dmlp = W0.shape[0] // 2

    WpT = params["predict_W"].astype(jnp.float32).T      # (2F, 1)
    wg = 0.5 * WpT[:F].T                                  # (1, F)
    wm_raw = WpT[F:]                                      # (F, 1)
    wm = 0.5 * s_prev * wm_raw.T                          # (1, F) fold BN_{L-1} + 0.5
    bf = params["predict_b"].astype(jnp.float32) + 0.5 * (t_prev @ wm_raw)   # (1, 1)

    return {
        "num_layers": num_layers,
        "num_factors": int(F),
        "mlp_dim": int(Dmlp),
        "user_emb_gmf": params["user_emb_gmf"].astype(compute_dtype),
        "item_emb_gmf": params["item_emb_gmf"].astype(compute_dtype),
        "user_emb_mlp": params["user_emb_mlp"].astype(compute_dtype),
        "item_emb_mlp": params["item_emb_mlp"].astype(compute_dtype),
        "W0": W0, "b0": b0,
        "layers": folded[1:],                             # [(W_i, b_i)] i >= 1
        "wg": wg, "wm": wm, "bf": bf,
    }


# ---------------------------------------------------------------------------
# Forward wrapper
# ---------------------------------------------------------------------------
def movie_ncf_forward(fp, user, item, *, tb_max=1024):
    B = int(user.shape[0])
    F = fp["num_factors"]
    Dmlp = fp["mlp_dim"]
    num_layers = fp["num_layers"]
    Din = 2 * Dmlp + 2 * F
    act_dtype = fp["user_emb_mlp"].dtype

    resident = [fp["W0"], fp["b0"]]
    for W, b in fp["layers"]:
        resident += [W, b]
    resident += [fp["wg"], fp["wm"], fp["bf"]]

    # ---- VMEM accounting (lane-padding aware) -------------------------------
    # Grid-invariant inputs are still budgeted x2 for the automatic pipeline
    # buffers (see TODO on pl.Buffered(1) above).
    resident_bytes = 2 * sum(_padded_vmem_bytes(a.shape, a.dtype) for a in resident)

    try:
        phys_vmem = int(getattr(pltpu.get_tpu_info(), "vmem_capacity_bytes", 64 << 20))
    except Exception:
        phys_vmem = 64 << 20                 # conservative (v7x per-TC VMEM)
    vmem_cap = max(16 << 20, min(phys_vmem - (16 << 20), 100 << 20))

    def tile_bytes(tb):
        in_b = 2 * _padded_vmem_bytes((tb, Din), act_dtype)      # dbl-buffered input
        out_b = 2 * _padded_vmem_bytes((tb, 1), jnp.float32)     # dbl-buffered output
        live = 3 * _padded_vmem_bytes((tb, max(2 * Dmlp, 128)), jnp.float32)
        return in_b + out_b + live

    slack = 2 << 20
    tb = max(16, _round_up(min(int(tb_max), _round_up(B, 16)), 16))
    while tb > 16 and resident_bytes + tile_bytes(tb) + slack > vmem_cap:
        tb = max(16, _round_up(tb // 2, 16))

    num_tiles = pl.cdiv(B, tb)
    # v7x megacore: prefer an even tile count so the "parallel" batch axis
    # splits evenly across both TensorCores (neutral on single-TC v5e/v6e).
    if num_tiles % 2 == 1:
        tb_alt = max(16, _round_up(pl.cdiv(B, num_tiles + 1), 16))
        if tb_alt < tb:
            tb = tb_alt
            num_tiles = pl.cdiv(B, tb)
    B_pad = num_tiles * tb

    vmem_limit = int(min(resident_bytes + tile_bytes(tb) + slack, vmem_cap))

    # ---- gather straight into the packed activation layout ------------------
    # (padded rows reuse index 0 and are discarded after the kernel)
    user_p = jnp.pad(user, (0, B_pad - B))
    item_p = jnp.pad(item, (0, B_pad - B))
    act = jnp.concatenate([
        jnp.take(fp["user_emb_mlp"], user_p, axis=0),
        jnp.take(fp["item_emb_mlp"], item_p, axis=0),
        jnp.take(fp["user_emb_gmf"], user_p, axis=0),
        jnp.take(fp["item_emb_gmf"], item_p, axis=0),
    ], axis=-1)                              # (B_pad, 2*Dmlp + 2*F) bf16

    ins = [act] + resident

    in_specs = ([pl.BlockSpec((tb, Din), lambda b: (b, 0))]
                + [pl.BlockSpec(a.shape, lambda b: (0, 0)) for a in resident])

    out = pl.pallas_call(
        functools.partial(_ncf_kernel, num_layers, Dmlp, F),
        grid=(num_tiles,),
        in_specs=in_specs,
        out_specs=pl.BlockSpec((tb, 1), lambda b: (b, 0)),
        out_shape=jax.ShapeDtypeStruct((B_pad, 1), jnp.float32),
        compiler_params=pltpu.CompilerParams(
            dimension_semantics=("parallel",),
            vmem_limit_bytes=vmem_limit,
        ),
    )(*ins)
    return out[:B, 0]   # matches prediction.view(-1)


# ---------------------------------------------------------------------------
# Parameter init (mirrors MovieNCF._init_weight_, PyTorch layouts, f32)
# ---------------------------------------------------------------------------
def init_params(key, num_users, num_items, num_factors, num_layers):
    mlp_dim = num_factors * 2 ** (num_layers - 1)
    keys = jax.random.split(key, 5 + num_layers)

    params = {
        "user_emb_gmf": 0.01 * jax.random.normal(keys[0], (num_users, num_factors), jnp.float32),
        "item_emb_gmf": 0.01 * jax.random.normal(keys[1], (num_items, num_factors), jnp.float32),
        "user_emb_mlp": 0.01 * jax.random.normal(keys[2], (num_users, mlp_dim), jnp.float32),
        "item_emb_mlp": 0.01 * jax.random.normal(keys[3], (num_items, mlp_dim), jnp.float32),
    }

    mlp_layers = []
    for i in range(num_layers):
        in_dim = num_factors * 2 ** (num_layers - i)
        out_dim = in_dim // 2
        limit = (6.0 / (in_dim + out_dim)) ** 0.5  # xavier_uniform
        W = jax.random.uniform(keys[4 + i], (out_dim, in_dim), jnp.float32, -limit, limit)
        mlp_layers.append({
            "W": W,
            "b": jnp.zeros((1, out_dim), jnp.float32),
            "gamma": jnp.ones((1, out_dim), jnp.float32),   # BN eval defaults
            "beta": jnp.zeros((1, out_dim), jnp.float32),
            "rmean": jnp.zeros((1, out_dim), jnp.float32),
            "rvar": jnp.ones((1, out_dim), jnp.float32),
        })
    params["mlp_layers"] = mlp_layers

    predict_in = num_factors * 2
    bound = (3.0 / predict_in) ** 0.5  # kaiming_uniform, gain(sigmoid)=1
    params["predict_W"] = jax.random.uniform(
        keys[4 + num_layers], (1, predict_in), jnp.float32, -bound, bound)
    params["predict_b"] = jnp.zeros((1, 1), jnp.float32)
    return params


def reference_forward(params, user, item):
    """Pure-JAX f32 reference with the original (un-folded) math."""
    ugmf = params["user_emb_gmf"][user]
    igmf = params["item_emb_gmf"][item]
    umlp = params["user_emb_mlp"][user]
    imlp = params["item_emb_mlp"][item]
    x = jnp.concatenate([umlp, imlp], axis=-1)
    for layer in params["mlp_layers"]:
        x = x @ layer["W"].T + layer["b"]
        x = jnp.maximum(x, 0.0)
        x = ((x - layer["rmean"]) * jax.lax.rsqrt(layer["rvar"] + BN_EPS)
             * layer["gamma"] + layer["beta"])
    vec = jnp.concatenate([ugmf * igmf * 0.5, x * 0.5], axis=-1)
    return (vec @ params["predict_W"].T + params["predict_b"]).reshape(-1)


if __name__ == "__main__":
    key = jax.random.PRNGKey(0)
    num_users, num_items = 30, 50
    num_factors, num_layers = 8, 3   # small but structurally faithful
    batch = 8

    pkey, ukey, ikey = jax.random.split(key, 3)
    params = init_params(pkey, num_users, num_items, num_factors, num_layers)
    folded = fold_params(params)
    user = jax.random.randint(ukey, (batch,), 0, num_users, dtype=jnp.int32)
    item = jax.random.randint(ikey, (batch,), 0, num_items, dtype=jnp.int32)

    pred = movie_ncf_forward(folded, user, item)
    pred = jax.block_until_ready(pred)
    assert pred.shape == (batch,) and pred.dtype == jnp.float32

    ref = jax.block_until_ready(reference_forward(params, user, item))
    # bf16 storage of embeddings/weights -> slightly looser tolerance than f32.
    assert jnp.allclose(pred, ref, rtol=5e-2, atol=3e-4), (pred, ref)

    print("KERNEL_OK")
</pallas_src>

<mosaic_0001>
module attributes {stable_mosaic.version = 11 : i64} {
  func.func @_ncf_kernel(%arg0: i32, %arg1: memref<16x80xbf16, #tpu.memory_space<vmem>>, %arg2: memref<64x32xbf16, #tpu.memory_space<vmem>>, %arg3: memref<1x32xf32, #tpu.memory_space<vmem>>, %arg4: memref<32x16xbf16, #tpu.memory_space<vmem>>, %arg5: memref<1x16xf32, #tpu.memory_space<vmem>>, %arg6: memref<16x8xbf16, #tpu.memory_space<vmem>>, %arg7: memref<1x8xf32, #tpu.memory_space<vmem>>, %arg8: memref<1x8xf32, #tpu.memory_space<vmem>>, %arg9: memref<1x8xf32, #tpu.memory_space<vmem>>, %arg10: memref<1x1xf32, #tpu.memory_space<vmem>>, %arg11: memref<16x1xf32, #tpu.memory_space<vmem>>) attributes {dimension_semantics = [#tpu.dimension_semantics<parallel>], iteration_bounds = array<i64: 1>, scalar_prefetch = 0 : i64, scratch_operands = 0 : i64, tpu.core_type = #tpu.core_type<tc>, window_params = [{transform_indices = @transform_0, window_bounds = array<i64: 16, 80>}, {pipeline_mode = #tpu.pipeline_mode<synchronous>, transform_indices = @transform_1, window_bounds = array<i64: 64, 32>}, {pipeline_mode = #tpu.pipeline_mode<synchronous>, transform_indices = @transform_2, window_bounds = array<i64: 1, 32>}, {pipeline_mode = #tpu.pipeline_mode<synchronous>, transform_indices = @transform_3, window_bounds = array<i64: 32, 16>}, {pipeline_mode = #tpu.pipeline_mode<synchronous>, transform_indices = @transform_4, window_bounds = array<i64: 1, 16>}, {pipeline_mode = #tpu.pipeline_mode<synchronous>, transform_indices = @transform_5, window_bounds = array<i64: 16, 8>}, {pipeline_mode = #tpu.pipeline_mode<synchronous>, transform_indices = @transform_6, window_bounds = array<i64: 1, 8>}, {pipeline_mode = #tpu.pipeline_mode<synchronous>, transform_indices = @transform_7, window_bounds = array<i64: 1, 8>}, {pipeline_mode = #tpu.pipeline_mode<synchronous>, transform_indices = @transform_8, window_bounds = array<i64: 1, 8>}, {pipeline_mode = #tpu.pipeline_mode<synchronous>, transform_indices = @transform_9, window_bounds = array<i64: 1, 1>}, {transform_indices = @transform_10, window_bounds = array<i64: 16, 1>}]} {
    %c0 = arith.constant 0 : index
    %c0_0 = arith.constant 0 : index
    %0 = vector.load %arg1[%c0, %c0_0] : memref<16x80xbf16, #tpu.memory_space<vmem>>, vector<16x80xbf16>
    %c0_1 = arith.constant 0 : index
    %c0_2 = arith.constant 0 : index
    %1 = vector.load %arg2[%c0_1, %c0_2] : memref<64x32xbf16, #tpu.memory_space<vmem>>, vector<64x32xbf16>
    %c0_3 = arith.constant 0 : index
    %c0_4 = arith.constant 0 : index
    %2 = vector.load %arg3[%c0_3, %c0_4] : memref<1x32xf32, #tpu.memory_space<vmem>>, vector<1x32xf32>
    %3 = vector.extract_strided_slice %0 {offsets = [0, 0], sizes = [16, 64], strides = [1, 1]} : vector<16x80xbf16> to vector<16x64xbf16>
    %cst = arith.constant dense<0.000000e+00> : vector<16x32xf32>
    %4 = tpu.matmul %3, %1, %cst {dimension_numbers = #tpu.dot_dimension_numbers<[1], [0], [0], [1], [0, 0, 1, 1], [], []>} : vector<16x64xbf16>, vector<64x32xbf16>, vector<16x32xf32> -> vector<16x32xf32>
    %5 = vector.broadcast %2 : vector<1x32xf32> to vector<16x32xf32>
    %6 = arith.addf %4, %5 : vector<16x32xf32>
    %cst_5 = arith.constant 0.000000e+00 : f32
    %7 = vector.broadcast %cst_5 : f32 to vector<16x32xf32>
    %8 = arith.maximumf %6, %7 : vector<16x32xf32>
    %c0_6 = arith.constant 0 : index
    %c0_7 = arith.constant 0 : index
    %9 = vector.load %arg4[%c0_6, %c0_7] : memref<32x16xbf16, #tpu.memory_space<vmem>>, vector<32x16xbf16>
    %c0_8 = arith.constant 0 : index
    %c0_9 = arith.constant 0 : index
    %10 = vector.load %arg5[%c0_8, %c0_9] : memref<1x16xf32, #tpu.memory_space<vmem>>, vector<1x16xf32>
    %11 = arith.truncf %8 : vector<16x32xf32> to vector<16x32xbf16>
    %cst_10 = arith.constant dense<0.000000e+00> : vector<16x16xf32>
    %12 = tpu.matmul %11, %9, %cst_10 {dimension_numbers = #tpu.dot_dimension_numbers<[1], [0], [0], [1], [0, 0, 1, 1], [], []>} : vector<16x32xbf16>, vector<32x16xbf16>, vector<16x16xf32> -> vector<16x16xf32>
    %13 = vector.broadcast %10 : vector<1x16xf32> to vector<16x16xf32>
    %14 = arith.addf %12, %13 : vector<16x16xf32>
    %cst_11 = arith.constant 0.000000e+00 : f32
    %15 = vector.broadcast %cst_11 : f32 to vector<16x16xf32>
    %16 = arith.maximumf %14, %15 : vector<16x16xf32>
    %c0_12 = arith.constant 0 : index
    %c0_13 = arith.constant 0 : index
    %17 = vector.load %arg6[%c0_12, %c0_13] : memref<16x8xbf16, #tpu.memory_space<vmem>>, vector<16x8xbf16>
    %c0_14 = arith.constant 0 : index
    %c0_15 = arith.constant 0 : index
    %18 = vector.load %arg7[%c0_14, %c0_15] : memref<1x8xf32, #tpu.memory_space<vmem>>, vector<1x8xf32>
    %19 = arith.truncf %16 : vector<16x16xf32> to vector<16x16xbf16>
    %cst_16 = arith.constant dense<0.000000e+00> : vector<16x8xf32>
    %20 = tpu.matmul %19, %17, %cst_16 {dimension_numbers = #tpu.dot_dimension_numbers<[1], [0], [0], [1], [0, 0, 1, 1], [], []>} : vector<16x16xbf16>, vector<16x8xbf16>, vector<16x8xf32> -> vector<16x8xf32>
    %21 = vector.broadcast %18 : vector<1x8xf32> to vector<16x8xf32>
    %22 = arith.addf %20, %21 : vector<16x8xf32>
    %cst_17 = arith.constant 0.000000e+00 : f32
    %23 = vector.broadcast %cst_17 : f32 to vector<16x8xf32>
    %24 = arith.maximumf %22, %23 : vector<16x8xf32>
    %c0_18 = arith.constant 0 : index
    %c0_19 = arith.constant 0 : index
    %25 = vector.load %arg8[%c0_18, %c0_19] : memref<1x8xf32, #tpu.memory_space<vmem>>, vector<1x8xf32>
    %c0_20 = arith.constant 0 : index
    %c0_21 = arith.constant 0 : index
    %26 = vector.load %arg9[%c0_20, %c0_21] : memref<1x8xf32, #tpu.memory_space<vmem>>, vector<1x8xf32>
    %c0_22 = arith.constant 0 : index
    %c0_23 = arith.constant 0 : index
    %27 = vector.load %arg10[%c0_22, %c0_23] : memref<1x1xf32, #tpu.memory_space<vmem>>, vector<1x1xf32>
    %28 = vector.extract_strided_slice %0 {offsets = [0, 64], sizes = [16, 8], strides = [1, 1]} : vector<16x80xbf16> to vector<16x8xbf16>
    %29 = arith.extf %28 : vector<16x8xbf16> to vector<16x8xf32>
    %30 = vector.extract_strided_slice %0 {offsets = [0, 72], sizes = [16, 8], strides = [1, 1]} : vector<16x80xbf16> to vector<16x8xbf16>
    %31 = arith.extf %30 : vector<16x8xbf16> to vector<16x8xf32>
    %32 = arith.mulf %29, %31 : vector<16x8xf32>
    %33 = vector.broadcast %25 : vector<1x8xf32> to vector<16x8xf32>
    %34 = arith.mulf %32, %33 : vector<16x8xf32>
    %35 = vector.broadcast %26 : vector<1x8xf32> to vector<16x8xf32>
    %36 = arith.mulf %24, %35 : vector<16x8xf32>
    %37 = arith.addf %34, %36 : vector<16x8xf32>
    %cst_24 = arith.constant dense<0.000000e+00> : vector<16xf32>
    %38 = vector.multi_reduction <add>, %37, %cst_24 [1] : vector<16x8xf32> to vector<16xf32>
    %39 = vector.shape_cast %38 : vector<16xf32> to vector<16x1xf32>
    %40 = vector.broadcast %27 : vector<1x1xf32> to vector<16x1xf32>
    %41 = arith.addf %39, %40 : vector<16x1xf32>
    %c0_25 = arith.constant 0 : index
    %c0_26 = arith.constant 0 : index
    %42 = vector.load %arg11[%c0_25, %c0_26] : memref<16x1xf32, #tpu.memory_space<vmem>>, vector<16x1xf32>
    tpu.vector_store %arg11[%c0_25, %c0_26], %41 {strides = array<i32>} : memref<16x1xf32, #tpu.memory_space<vmem>>, vector<16x1xf32>,
    return
  }
  func.func @transform_0(%arg0: i32) -> (i32, i32) {
    %c0_i32 = arith.constant 0 : i32
    %c0_i32_0 = arith.constant 0 : i32
    return %arg0, %c0_i32 : i32, i32
  }
  func.func @transform_1(%arg0: i32) -> (i32, i32) {
    %c0_i32 = arith.constant 0 : i32
    %c0_i32_0 = arith.constant 0 : i32
    %c0_i32_1 = arith.constant 0 : i32
    return %c0_i32, %c0_i32_0 : i32, i32
  }
  func.func @transform_2(%arg0: i32) -> (i32, i32) {
    %c0_i32 = arith.constant 0 : i32
    %c0_i32_0 = arith.constant 0 : i32
    %c0_i32_1 = arith.constant 0 : i32
    return %c0_i32, %c0_i32_0 : i32, i32
  }
  func.func @transform_3(%arg0: i32) -> (i32, i32) {
    %c0_i32 = arith.constant 0 : i32
    %c0_i32_0 = arith.constant 0 : i32
    %c0_i32_1 = arith.constant 0 : i32
    return %c0_i32, %c0_i32_0 : i32, i32
  }
  func.func @transform_4(%arg0: i32) -> (i32, i32) {
    %c0_i32 = arith.constant 0 : i32
    %c0_i32_0 = arith.constant 0 : i32
    %c0_i32_1 = arith.constant 0 : i32
    return %c0_i32, %c0_i32_0 : i32, i32
  }
  func.func @transform_5(%arg0: i32) -> (i32, i32) {
    %c0_i32 = arith.constant 0 : i32
    %c0_i32_0 = arith.constant 0 : i32
    %c0_i32_1 = arith.constant 0 : i32
    return %c0_i32, %c0_i32_0 : i32, i32
  }
  func.func @transform_6(%arg0: i32) -> (i32, i32) {
    %c0_i32 = arith.constant 0 : i32
    %c0_i32_0 = arith.constant 0 : i32
    %c0_i32_1 = arith.constant 0 : i32
    return %c0_i32, %c0_i32_0 : i32, i32
  }
  func.func @transform_7(%arg0: i32) -> (i32, i32) {
    %c0_i32 = arith.constant 0 : i32
    %c0_i32_0 = arith.constant 0 : i32
    %c0_i32_1 = arith.constant 0 : i32
    return %c0_i32, %c0_i32_0 : i32, i32
  }
  func.func @transform_8(%arg0: i32) -> (i32, i32) {
    %c0_i32 = arith.constant 0 : i32
    %c0_i32_0 = arith.constant 0 : i32
    %c0_i32_1 = arith.constant 0 : i32
    return %c0_i32, %c0_i32_0 : i32, i32
  }
  func.func @transform_9(%arg0: i32) -> (i32, i32) {
    %c0_i32 = arith.constant 0 : i32
    %c0_i32_0 = arith.constant 0 : i32
    %c0_i32_1 = arith.constant 0 : i32
    return %c0_i32, %c0_i32_0 : i32, i32
  }
  func.func @transform_10(%arg0: i32) -> (i32, i32) {
    %c0_i32 = arith.constant 0 : i32
    %c0_i32_0 = arith.constant 0 : i32
    return %arg0, %c0_i32 : i32, i32
  }
}

</mosaic_0001>

<llo_original>
// kernel: tpu_custom_call.1
$region0: #{tpu_custom_call.1}
  #allocation0 [shape = 'u32[]', space=smem, size = 0x4, offset = 0x4, fixed_abs, tag = 'smem constant byte address 0x4 - core index']
  #allocation1 [shape = 'u32[72,128]{1,0:T(1,128)}', space=vmem, size = 0x9000, scoped, tag = 'internal scratch']
  #allocation2 [shape = 'f32[1,1]{1,0:T(1,128)S(1)}', space=vmem, size = 0x200, scoped, tag = 'scoped memory for tpu_custom_call.1']
  %s0 = inlined_call_operand.vmem [shape: bf16[16,80], index: 0, kind: input, shape index: {}]
  %s1 = inlined_call_operand.vmem [shape: bf16[64,32], index: 1, kind: input, shape index: {}]
  %s2 = inlined_call_operand.vmem [shape: f32[1,32], index: 2, kind: input, shape index: {}]
  %s3 = inlined_call_operand.vmem [shape: bf16[32,16], index: 3, kind: input, shape index: {}]
  %s4 = inlined_call_operand.vmem [shape: f32[1,16], index: 4, kind: input, shape index: {}]
  %s5 = inlined_call_operand.vmem [shape: bf16[16,8], index: 5, kind: input, shape index: {}]
  %s6 = inlined_call_operand.vmem [shape: f32[1,8], index: 6, kind: input, shape index: {}]
  %s7 = inlined_call_operand.vmem [shape: f32[1,8], index: 7, kind: input, shape index: {}]
  %s8 = inlined_call_operand.vmem [shape: f32[1,8], index: 8, kind: input, shape index: {}]
  %s9 = inlined_call_operand.<no memory space> [shape: f32[1,1], index: 9, kind: input, shape index: {}]
  %s10 = inlined_call_operand.vmem [shape: f32[16,1], index: 10, kind: output, shape index: {}]
  %s11 = sld [smem:[#allocation0]]
  $region50: #{tpu_custom_call.1} parent=0
    _
  %s13 = ssub.s32 1, %s11
  %s14 = scalar_select 0, %s13, %s11
  %v15 = vstv %s9
  %16 = vst [vmem:[#allocation2] sm:$0x1] %v15
  // Predicated region
  $region2: #{tpu_custom_call.1} parent=0 // pred_check
    _
  $region3: #{tpu_custom_call.1} parent=0 // pred_check_branch
    %18 = sbr.rel (0) target = $region5
  $region4: #{tpu_custom_call.1} parent=0 // pred_region
    _
  $region5: #{tpu_custom_call.1} parent=0 // pred_fallthru
    _
  // Predicated region
  $region6: #{tpu_custom_call.1} parent=0 // pred_check
    _
  $region7: #{tpu_custom_call.1} parent=0 // pred_check_branch
    %20 = sbr.rel (0) target = $region9
  $region8: #{tpu_custom_call.1} parent=0 // pred_region
    _
  $region9: #{tpu_custom_call.1} parent=0 // pred_fallthru
    _
  // Predicated region
  $region10: #{tpu_custom_call.1} parent=0 // pred_check
    _
  $region11: #{tpu_custom_call.1} parent=0 // pred_check_branch
    %22 = sbr.rel (0) target = $region13
  $region12: #{tpu_custom_call.1} parent=0 // pred_region
    _
  $region13: #{tpu_custom_call.1} parent=0 // pred_fallthru
    _
  // Predicated region
  $region14: #{tpu_custom_call.1} parent=0 // pred_check
    _
  $region15: #{tpu_custom_call.1} parent=0 // pred_check_branch
    %24 = sbr.rel (0) target = $region17
  $region16: #{tpu_custom_call.1} parent=0 // pred_region
    _
  $region17: #{tpu_custom_call.1} parent=0 // pred_fallthru
    _
  // Predicated region
  $region18: #{tpu_custom_call.1} parent=0 // pred_check
    _
  $region19: #{tpu_custom_call.1} parent=0 // pred_check_branch
    %26 = sbr.rel (0) target = $region21
  $region20: #{tpu_custom_call.1} parent=0 // pred_region
    _
  $region21: #{tpu_custom_call.1} parent=0 // pred_fallthru
    _
  // Predicated region
  $region22: #{tpu_custom_call.1} parent=0 // pred_check
    _
  $region23: #{tpu_custom_call.1} parent=0 // pred_check_branch
    %28 = sbr.rel (0) target = $region25
  $region24: #{tpu_custom_call.1} parent=0 // pred_region
    _
  $region25: #{tpu_custom_call.1} parent=0 // pred_fallthru
    _
  // Predicated region
  $region26: #{tpu_custom_call.1} parent=0 // pred_check
    _
  $region27: #{tpu_custom_call.1} parent=0 // pred_check_branch
    %30 = sbr.rel (0) target = $region29
  $region28: #{tpu_custom_call.1} parent=0 // pred_region
    _
  $region29: #{tpu_custom_call.1} parent=0 // pred_fallthru
    _
  // Predicated region
  $region30: #{tpu_custom_call.1} parent=0 // pred_check
    _
  $region31: #{tpu_custom_call.1} parent=0 // pred_check_branch
    %32 = sbr.rel (0) target = $region33
  $region32: #{tpu_custom_call.1} parent=0 // pred_region
    _
  $region33: #{tpu_custom_call.1} parent=0 // pred_fallthru
    _
  // Predicated region
  $region34: #{tpu_custom_call.1} parent=0 // pred_check
    _
  $region35: #{tpu_custom_call.1} parent=0 // pred_check_branch
    %34 = sbr.rel (0) target = $region37
  $region36: #{tpu_custom_call.1} parent=0 // pred_region
    _
  $region37: #{tpu_custom_call.1} parent=0 // pred_fallthru
    _
  // Predicated region
  $region38: #{tpu_custom_call.1} parent=0 // pred_check
    _
  $region39: #{tpu_custom_call.1} parent=0 // pred_check_branch
    %36 = sbr.rel (0) target = $region41
  $region40: #{tpu_custom_call.1} parent=0 // pred_region
    _
  $region41: #{tpu_custom_call.1} parent=0 // pred_fallthru
    _
  %v38 = vld [vmem:[%s0] sm:$0xf]
  %v39 = vld [vmem:[%s0 + $0x4] sm:$0xf]
  %v40 = vld [vmem:[%s1] sm:$0xf]
  %v41 = vld [vmem:[%s1 + $0x4] sm:$0xf]
  %v42 = vld [vmem:[%s1 + $0x8] sm:$0xf]
  %v43 = vld [vmem:[%s1 + $0xc] sm:$0xf]
  %v44 = vld [vmem:[%s1 + $0x10] sm:$0xf]
  %v45 = vld [vmem:[%s1 + $0x14] sm:$0xf]
  %v46 = vld [vmem:[%s1 + $0x18] sm:$0xf]
  %v47 = vld [vmem:[%s1 + $0x1c] sm:$0xf]
  %v48 = vld [vmem:[%s2] sm:$0x1]
  %v50 = vperm.slane %v48, 0
  %v54 = vunpack.c.l.b16 %v38
  %v55 = vunpack.c.l.b16 %v39
  %v56 = vpack.c.b16 %v55, %v54
  %v65 = vunpack.c.l.b16 %v40
  %v66 = vunpack.c.l.b16 %v41
  %v67 = vunpack.c.l.b16 %v42
  %v68 = vunpack.c.l.b16 %v43
  %v69 = vunpack.c.l.b16 %v44
  %v70 = vunpack.c.l.b16 %v45
  %v71 = vunpack.c.l.b16 %v46
  %v72 = vunpack.c.l.b16 %v47
  %v73 = vpack.c.b16 %v66, %v65
  %v74 = vpack.c.b16 %v68, %v67
  %v75 = vpack.c.b16 %v70, %v69
  %v76 = vpack.c.b16 %v72, %v71
  %vm81 = vcmask 523264
  %v83 = vsel %vm81, %v56, 0
  %85 = vmatpush.bf16.msra.mxu0 0
  %86 = vmatpush.bf16.msra.mxu0 0
  %87 = vmatpush.bf16.msra.mxu0 0
  %88 = vmatpush.bf16.msra.mxu0 0
  %89 = vmatpush.bf16.msra.mxu0 %v76
  %90 = vmatpush.bf16.msra.mxu0 %v75
  %91 = vmatpush.bf16.msra.mxu0 %v74
  %92 = vmatpush.bf16.msra.mxu0 %v73
  %93 = vmatmul.bf16.gmra.mxu0 %v83
  %v94 = vpop.f32.mrf.mxu0
  %v95 = vadd.f32 %v50, %v94
  %v96 = vpop.f32.mrf.mxu0
  %v97 = vadd.f32 %v50, %v96
  %98 = vdwg.mxu0
  %v99 = vmax.f32 %v95, 0.0
  %v100 = vmax.f32 %v97, 0.0
  %v101 = vld [vmem:[%s3] sm:$0xf]
  %v102 = vld [vmem:[%s3 + $0x4] sm:$0xf]
  %v103 = vld [vmem:[%s3 + $0x8] sm:$0xf]
  %v104 = vld [vmem:[%s3 + $0xc] sm:$0xf]
  %v105 = vld [vmem:[%s4] sm:$0x1]
  %v106 = vpack.c.bf16 %v100, %v99
  %v108 = vperm.slane %v105, 0
  %v114 = vunpack.c.l.b16 %v101
  %v115 = vunpack.c.l.b16 %v102
  %v116 = vunpack.c.l.b16 %v103
  %v117 = vunpack.c.l.b16 %v104
  %v118 = vpack.c.b16 %v115, %v114
  %v119 = vpack.c.b16 %v117, %v116
  %vm122 = vcmask 261120
  %v124 = vsel %vm122, %v106, 0
  %126 = vmatpush.bf16.msra.mxu0 0
  %127 = vmatpush.bf16.msra.mxu0 0
  %128 = vmatpush.bf16.msra.mxu0 0
  %129 = vmatpush.bf16.msra.mxu0 0
  %130 = vmatpush.bf16.msra.mxu0 0
  %131 = vmatpush.bf16.msra.mxu0 0
  %132 = vmatpush.bf16.msra.mxu0 %v119
  %133 = vmatpush.bf16.msra.mxu0 %v118
  %134 = vmatmul.bf16.gmra.mxu0 %v124
  %v135 = vpop.f32.mrf.mxu0
  %v136 = vadd.f32 %v108, %v135
  %v137 = vpop.f32.mrf.mxu0
  %v138 = vadd.f32 %v108, %v137
  %139 = vdwg.mxu0
  %v140 = vmax.f32 %v136, 0.0
  %v141 = vmax.f32 %v138, 0.0
  %v142 = vld [vmem:[%s5] sm:$0xf]
  %v143 = vld [vmem:[%s5 + $0x4] sm:$0xf]
  %v144 = vld [vmem:[%s6] sm:$0x1]
  %v145 = vpack.c.bf16 %v141, %v140
  %v147 = vperm.slane %v144, 0
  %v151 = vunpack.c.l.b16 %v142
  %v152 = vunpack.c.l.b16 %v143
  %v153 = vpack.c.b16 %v152, %v151
  %vm155 = vcmask 130048
  %v157 = vsel %vm155, %v145, 0
  %159 = vmatpush.bf16.msra.mxu0 0
  %160 = vmatpush.bf16.msra.mxu0 0
  %161 = vmatpush.bf16.msra.mxu0 0
  %162 = vmatpush.bf16.msra.mxu0 0
  %163 = vmatpush.bf16.msra.mxu0 0
  %164 = vmatpush.bf16.msra.mxu0 0
  %165 = vmatpush.bf16.msra.mxu0 0
  %166 = vmatpush.bf16.msra.mxu0 %v153
  %167 = vmatmul.bf16.gmra.mxu0 %v157
  %v168 = vpop.f32.mrf.mxu0
  %v169 = vadd.f32 %v147, %v168
  %v170 = vpop.f32.mrf.mxu0
  %v171 = vadd.f32 %v147, %v170
  %172 = vdwg.mxu0
  %v173 = vmax.f32 %v169, 0.0
  %v174 = vmax.f32 %v171, 0.0
  %v175 = vld [vmem:[%s7] sm:$0x1]
  %v176 = vld [vmem:[%s8] sm:$0x1]
  %v177 = vld [vmem:[#allocation2] sm:$0x1]
  %v178 = vunpack.c.l.bf16 %v38
  %v179 = vunpack.c.l.bf16 %v39
  %182 = vrot.lane.b32.xlu0 %v178, 120
  %v183 = vpop.permute.xlu0 %182
  %184 = vrot.lane.b32.xlu0 %v179, 120
  %v185 = vpop.permute.xlu0 %184
  %v188 = vmul.f32 %v178, %v183
  %v189 = vmul.f32 %v179, %v185
  %v191 = vperm.slane %v175, 0
  %192 = vrot.lane.b32.xlu0 %v191, 64
  %v193 = vpop.permute.xlu0 %192
  %v195 = vmul.f32 %v188, %v193
  %v196 = vmul.f32 %v189, %v193
  %v198 = vperm.slane %v176, 0
  %v200 = vmul.f32 %v173, %v198
  %v201 = vmul.f32 %v174, %v198
  %204 = vrot.lane.b32.xlu0 %v200, 64
  %v205 = vpop.permute.xlu0 %204
  %206 = vrot.lane.b32.xlu0 %v201, 64
  %v207 = vpop.permute.xlu0 %206
  %v210 = vadd.f32 %v195, %v205
  %v211 = vadd.f32 %v196, %v207
  %214 = vrot.lane.b32.xlu0 %v210, 64
  %v215 = vpop.permute.xlu0 %214
  %216 = vrot.lane.b32.xlu0 %v211, 64
  %v217 = vpop.permute.xlu0 %216
  %vm220 = vcmask 64512
  %v221 = vsel %vm220, %v215, 0.0
  %222 = vadd.xlane.f32.xlu0 %v221
  %v223 = vpop.xlane.xlu0 %222
  %v224 = vsel %vm220, %v217, 0.0
  %225 = vadd.xlane.f32.xlu0 %v224
  %v226 = vpop.xlane.xlu0 %225
  %v228 = vperm.slane %v177, 0
  %v230 = vadd.f32 %v223, %v228
  %v231 = vadd.f32 %v226, %v228
  %vm232 = vcmask 7168
  %233 = vst.msk [vmem:[%s10] sm:$0xff] %vm232, %v230
  %234 = vst.msk [vmem:[%s10 + $0x8] sm:$0xff] %vm232, %v231
  // Predicated region
  $region42: #{tpu_custom_call.1} parent=0 // pred_check
    _
  $region43: #{tpu_custom_call.1} parent=0 // pred_check_branch
    %236 = sbr.rel (0) target = $region45
  $region44: #{tpu_custom_call.1} parent=0 // pred_region
    _
  $region45: #{tpu_custom_call.1} parent=0 // pred_fallthru
    _
  // Predicated region
  $region46: #{tpu_custom_call.1} parent=0 // pred_check
    _
  $region47: #{tpu_custom_call.1} parent=0 // pred_check_branch
    %238 = sbr.rel (0) target = $region49
  $region48: #{tpu_custom_call.1} parent=0 // pred_region
    _
  $region49: #{tpu_custom_call.1} parent=0 // pred_fallthru
    _

</llo_original>
